<compile_context>
chip_gen: v7x
topology: tpu7x:2x2x1
jax: 0.10.0
libtpu: 0.0.40
codegen_flags: <defaults>
</compile_context>

<pallas_src>
import functools

import jax
import jax.numpy as jnp
from jax.experimental import pallas as pl
from jax.experimental.pallas import tpu as pltpu


def _convblock_kernel(w_ref, p_ref, gamma_ref, beta_ref, alpha_ref,
                      out_ref, sum_ref, ssq_ref, *ybuf, n_valid, eps):
    """Fused Conv(as GEMM) + BatchNorm(training stats) + PReLU.

    Grid = (2, num_n_tiles): axis 0 = phase, axis 1 tiles the flattened
    N = B*Fo*To axis (lane axis).  Layout is lane-dense: out[Cout, N].

      phase 0: y = W @ P_tile; accumulate per-channel sum / sum-of-squares in
               persistent VMEM scratch; if a residency buffer was allocated,
               also park y in VMEM.
      phase 1: fetch y (from the residency buffer, or recompute it), normalize
               with the accumulated global stats, apply gamma/beta + PReLU,
               store the [Cout, tileN] output tile.
    """
    y_resident = len(ybuf) > 0
    phase = pl.program_id(0)
    nt = pl.program_id(1)

    @pl.when(phase == 0)
    def _():
        @pl.when(nt == 0)
        def _():
            sum_ref[...] = jnp.zeros_like(sum_ref)
            ssq_ref[...] = jnp.zeros_like(ssq_ref)

        # Conv as a [Cout,K] x [K,tileN] matmul with f32 accumulation.  The MXU
        # is heavily padded at these channel counts, but the tile math is
        # negligible next to the patch DMA.
        y = jnp.dot(w_ref[...], p_ref[...], preferred_element_type=jnp.float32)

        # Zero-padded patch columns give y == 0 exactly (no conv bias), so they
        # do not perturb the statistics; we divide by the true n_valid below.
        sum_ref[...] += jnp.sum(y, axis=1, keepdims=True)
        ssq_ref[...] += jnp.sum(y * y, axis=1, keepdims=True)

        if y_resident:
            ybuf[0][nt] = y                     # park tile for phase 1

    @pl.when(phase == 1)
    def _():
        if y_resident:
            y = ybuf[0][nt]                     # no patch re-read, no 2nd GEMM
        else:
            y = jnp.dot(w_ref[...], p_ref[...],
                        preferred_element_type=jnp.float32)

        inv_n = jnp.float32(1.0 / n_valid)
        mean = sum_ref[...] * inv_n                        # [Cout, 1]
        var = ssq_ref[...] * inv_n - mean * mean           # biased (train) var
        scale = gamma_ref[...] * jax.lax.rsqrt(var + eps)  # EUP rsqrt
        shift = beta_ref[...] - mean * scale
        z = scale * y + shift
        alpha = alpha_ref[0]                               # PReLU slope (SMEM)
        out_ref[...] = jnp.where(z >= 0, z, alpha * z)


def conv_block_forward(x, conv_w, conv_b, bn_gamma, bn_beta, prelu_a, *,
                       causal=True, eps=1e-5, compute_dtype=jnp.float32,
                       tile_n=None, y_resident=None):
    """ConvBlock forward.  x: [B, Cin, F, T] (NCHW).  Returns [B, Cout, Fo, To]."""
    B, Cin, F, T = x.shape
    Cout, _, KF, KT = conv_w.shape
    stride_f, stride_t = 2, 1
    pad_t = 1

    Fo = (F - KF) // stride_f + 1
    To_full = (T + 2 * pad_t - KT) // stride_t + 1
    To = To_full - 1 if causal else To_full      # causal drops last time frame

    # ---- im2col glue: patches laid out [K, N] so N = B*Fo*To (To innermost)
    # is on the lane axis and the Cout output channels land on sublanes.
    # TODO(synk): form patches in-kernel from the NCHW tile (per-tap strided
    # loads / accumulate) to avoid the ~KF*KT x HBM blow-up of im2col.
    x_pad = jnp.pad(x, ((0, 0), (0, 0), (0, 0), (pad_t, pad_t)))
    taps = []
    for kf in range(KF):
        for kt in range(KT):
            taps.append(x_pad[:, :,
                              kf:kf + stride_f * (Fo - 1) + 1:stride_f,
                              kt:kt + To])                      # [B,Cin,Fo,To]
    # [KF*KT, B, Cin, Fo, To] -> [Cin, KF*KT, B, Fo, To] -> [K, N]
    patches = jnp.stack(taps, axis=0)
    patches = jnp.transpose(patches, (2, 0, 1, 3, 4))
    K = Cin * KF * KT
    N = B * Fo * To
    patches = patches.reshape(K, N)

    if tile_n is None:
        tile_n = 128 if N <= 4096 else 512       # small problem -> exercise tiling
    n_pad = ((N + tile_n - 1) // tile_n) * tile_n
    if n_pad != N:
        patches = jnp.pad(patches, ((0, 0), (0, n_pad - N)))
    num_tiles = n_pad // tile_n

    # Keep the conv output resident in VMEM between phases when it fits.
    if y_resident is None:
        y_resident = (num_tiles * Cout * tile_n * 4) <= 8 * 1024 * 1024

    # Conv bias dropped on purpose: training-mode BatchNorm subtracts the
    # per-channel mean right after the conv, so a per-channel constant bias is
    # algebraically cancelled.
    # TODO(synk): if BN is ever switched to eval mode (running stats), fold the
    # bias back into `shift` inside the kernel.
    del conv_b

    w_mat = conv_w.reshape(Cout, K).astype(compute_dtype)
    patches = patches.astype(compute_dtype)
    g_col = bn_gamma.reshape(Cout, 1).astype(jnp.float32)
    b_col = bn_beta.reshape(Cout, 1).astype(jnp.float32)
    a_smem = jnp.asarray(prelu_a, jnp.float32).reshape(1)

    kernel = functools.partial(_convblock_kernel, n_valid=N, eps=eps)

    # Resident path: during phase 1 the patch block index is held constant so
    # the pipeline issues no further patch DMAs (one stale tile fetch at the
    # phase boundary, nothing else).
    if y_resident:
        patch_idx = lambda p, n: (0, n * (1 - p))
    else:
        patch_idx = lambda p, n: (0, n)

    scratch_shapes = [
        pltpu.VMEM((Cout, 1), jnp.float32),   # per-channel sum
        pltpu.VMEM((Cout, 1), jnp.float32),   # per-channel sum of squares
    ]
    if y_resident:
        scratch_shapes.append(pltpu.VMEM((num_tiles, Cout, tile_n), jnp.float32))

    # TODO(synk): on v7x, split the phase-0 n-tile axis across the 2 TensorCores
    # (per-core partial sum/sumsq combined before phase 1) for ~2x on the conv phase.
    out_flat = pl.pallas_call(
        kernel,
        out_shape=jax.ShapeDtypeStruct((Cout, n_pad), jnp.float32),
        grid_spec=pltpu.PrefetchScalarGridSpec(
            num_scalar_prefetch=0,
            grid=(2, num_tiles),                              # (phase, n-tile)
            in_specs=[
                pl.BlockSpec((Cout, K), lambda p, n: (0, 0)),       # W  [Cout,K]
                pl.BlockSpec((K, tile_n), patch_idx),               # patches
                pl.BlockSpec((Cout, 1), lambda p, n: (0, 0)),       # gamma
                pl.BlockSpec((Cout, 1), lambda p, n: (0, 0)),       # beta
                pl.BlockSpec(memory_space=pltpu.MemorySpace.SMEM),  # alpha
            ],
            # During phase 0 the kernel never writes the output; keeping the
            # output block index constant there (n * p == 0) means no
            # un-written tile is ever flushed to HBM and every output tile is
            # stored exactly once (during phase 1).
            out_specs=pl.BlockSpec((Cout, tile_n), lambda p, n: (0, n * p)),
            scratch_shapes=scratch_shapes,
        ),
        compiler_params=pltpu.CompilerParams(
            # phase axis is sequential; the n-tile axis carries the BN
            # accumulator (and residency buffer), so it is "arbitrary" as well.
            dimension_semantics=("arbitrary", "arbitrary"),
            vmem_limit_bytes=32 * 1024 * 1024,
        ),
    )(w_mat, patches, g_col, b_col, a_smem)

    # [Cout, n_pad] -> [Cout, B, Fo, To] -> NCHW.  The lane (To) axis never
    # moves, so this is a cheap outer-axis relabel, not a lane transpose.
    out = out_flat[:, :N].reshape(Cout, B, Fo, To)
    return jnp.transpose(out, (1, 0, 2, 3))


def _reference(x, conv_w, conv_b, bn_gamma, bn_beta, prelu_a):
    """Pure-JAX reference (conv -> causal slice -> train-mode BN -> PReLU)."""
    y = jax.lax.conv_general_dilated(
        x, conv_w, window_strides=(2, 1), padding=((0, 0), (1, 1)),
        dimension_numbers=("NCHW", "OIHW", "NCHW"))
    y = y + conv_b.reshape(1, -1, 1, 1)
    y = y[:, :, :, :-1]                       # causal
    mean = jnp.mean(y, axis=(0, 2, 3), keepdims=True)
    var = jnp.mean((y - mean) ** 2, axis=(0, 2, 3), keepdims=True)
    yh = (y - mean) * jax.lax.rsqrt(var + 1e-5)
    z = bn_gamma.reshape(1, -1, 1, 1) * yh + bn_beta.reshape(1, -1, 1, 1)
    return jnp.where(z >= 0, z, prelu_a * z)


if __name__ == "__main__":
    key = jax.random.PRNGKey(0)
    B, Cin, Cout, F, T = 2, 4, 8, 16, 16
    KF, KT = 3, 2

    kx, kw = jax.random.split(key)
    x = jax.random.normal(kx, (B, Cin, F, T), dtype=jnp.float32)

    # deterministic parameter init (mirrors the PyTorch module's __init__)
    fan_in, fan_out = Cin * KF * KT, Cout * KF * KT
    limit = (6.0 / (fan_in + fan_out)) ** 0.5               # xavier_uniform_
    conv_w = jax.random.uniform(kw, (Cout, Cin, KF, KT), jnp.float32, -limit, limit)
    conv_b = jnp.zeros((Cout,), jnp.float32)                 # zeros_
    bn_gamma = jnp.ones((Cout,), jnp.float32)
    bn_beta = jnp.zeros((Cout,), jnp.float32)
    prelu_a = jnp.asarray(0.25, jnp.float32)                 # PReLU default

    ref = _reference(x, conv_w, conv_b, bn_gamma, bn_beta, prelu_a)

    # f32 path, VMEM-resident conv output: strict check against XLA reference.
    out = conv_block_forward(x, conv_w, conv_b, bn_gamma, bn_beta, prelu_a,
                             causal=True)
    out = jax.block_until_ready(out)
    assert out.shape == (B, Cout, (F - KF) // 2 + 1, T), out.shape
    assert jnp.allclose(out, ref, rtol=1e-4, atol=1e-4), \
        float(jnp.max(jnp.abs(out - ref)))

    # f32 path, recompute (non-resident) fallback: same strict check.
    out_rc = conv_block_forward(x, conv_w, conv_b, bn_gamma, bn_beta, prelu_a,
                                causal=True, y_resident=False)
    out_rc = jax.block_until_ready(out_rc)
    assert jnp.allclose(out_rc, ref, rtol=1e-4, atol=1e-4), \
        float(jnp.max(jnp.abs(out_rc - ref)))

    # bf16 MXU-input path (v6e/v7x production setting): compare against a
    # reference whose conv inputs are rounded to bf16 the same way.
    out_bf16 = conv_block_forward(x, conv_w, conv_b, bn_gamma, bn_beta, prelu_a,
                                  causal=True, compute_dtype=jnp.bfloat16)
    out_bf16 = jax.block_until_ready(out_bf16)
    ref_bf16 = _reference(x.astype(jnp.bfloat16).astype(jnp.float32),
                          conv_w.astype(jnp.bfloat16).astype(jnp.float32),
                          conv_b, bn_gamma, bn_beta, prelu_a)
    assert jnp.allclose(out_bf16, ref_bf16, rtol=1e-2, atol=1e-2), \
        float(jnp.max(jnp.abs(out_bf16 - ref_bf16)))

    print("KERNEL_OK")
</pallas_src>

<mosaic_0001>
module attributes {stable_mosaic.version = 11 : i64} {
  func.func @_convblock_kernel(%arg0: i32, %arg1: i32, %arg2: memref<8x24xf32, #tpu.memory_space<vmem>>, %arg3: memref<24x128xf32, #tpu.memory_space<vmem>>, %arg4: memref<8x1xf32, #tpu.memory_space<vmem>>, %arg5: memref<8x1xf32, #tpu.memory_space<vmem>>, %arg6: memref<1xf32, #tpu.memory_space<smem>>, %arg7: memref<8x128xf32, #tpu.memory_space<vmem>>, %arg8: memref<8x1xf32, #tpu.memory_space<vmem>>, %arg9: memref<8x1xf32, #tpu.memory_space<vmem>>, %arg10: memref<2x8x128xf32, #tpu.memory_space<vmem>>) attributes {dimension_semantics = [#tpu.dimension_semantics<arbitrary>, #tpu.dimension_semantics<arbitrary>], iteration_bounds = array<i64: 2, 2>, scalar_prefetch = 0 : i64, scratch_operands = 3 : i64, tpu.core_type = #tpu.core_type<tc>, window_params = [{pipeline_mode = #tpu.pipeline_mode<synchronous>, transform_indices = @transform_0, window_bounds = array<i64: 8, 24>}, {transform_indices = @transform_1, window_bounds = array<i64: 24, 128>}, {pipeline_mode = #tpu.pipeline_mode<synchronous>, transform_indices = @transform_2, window_bounds = array<i64: 8, 1>}, {pipeline_mode = #tpu.pipeline_mode<synchronous>, transform_indices = @transform_3, window_bounds = array<i64: 8, 1>}, {transform_indices = @transform_4, window_bounds = array<i64: 1>}, {transform_indices = @transform_5, window_bounds = array<i64: 8, 128>}]} {
    %c0_i32 = arith.constant 0 : i32
    %0 = arith.cmpi eq, %arg0, %c0_i32 : i32
    %1 = arith.extui %0 : i1 to i32
    %c0_i32_0 = arith.constant 0 : i32
    %2 = arith.cmpi ne, %1, %c0_i32_0 : i32
    scf.if %2 {
      %c0_i32_2 = arith.constant 0 : i32
      %6 = arith.cmpi eq, %arg1, %c0_i32_2 : i32
      %7 = arith.extui %6 : i1 to i32
      %c0_i32_3 = arith.constant 0 : i32
      %8 = arith.cmpi ne, %7, %c0_i32_3 : i32
      scf.if %8 {
        %cst_19 = arith.constant 0.000000e+00 : f32
        %27 = vector.broadcast %cst_19 : f32 to vector<8x1xf32>
        %c0_20 = arith.constant 0 : index
        %c0_21 = arith.constant 0 : index
        %28 = vector.load %arg8[%c0_20, %c0_21] : memref<8x1xf32, #tpu.memory_space<vmem>>, vector<8x1xf32>
        tpu.vector_store %arg8[%c0_20, %c0_21], %27 {strides = array<i32>} : memref<8x1xf32, #tpu.memory_space<vmem>>, vector<8x1xf32>,
        %cst_22 = arith.constant 0.000000e+00 : f32
        %29 = vector.broadcast %cst_22 : f32 to vector<8x1xf32>
        %c0_23 = arith.constant 0 : index
        %c0_24 = arith.constant 0 : index
        %30 = vector.load %arg9[%c0_23, %c0_24] : memref<8x1xf32, #tpu.memory_space<vmem>>, vector<8x1xf32>
        tpu.vector_store %arg9[%c0_23, %c0_24], %29 {strides = array<i32>} : memref<8x1xf32, #tpu.memory_space<vmem>>, vector<8x1xf32>,
      } else {
      }
      %c0 = arith.constant 0 : index
      %c0_4 = arith.constant 0 : index
      %9 = vector.load %arg2[%c0, %c0_4] : memref<8x24xf32, #tpu.memory_space<vmem>>, vector<8x24xf32>
      %c0_5 = arith.constant 0 : index
      %c0_6 = arith.constant 0 : index
      %10 = vector.load %arg3[%c0_5, %c0_6] : memref<24x128xf32, #tpu.memory_space<vmem>>, vector<24x128xf32>
      %cst = arith.constant dense<0.000000e+00> : vector<8x128xf32>
      %11 = tpu.matmul %9, %10, %cst {dimension_numbers = #tpu.dot_dimension_numbers<[1], [0], [0], [1], [0, 0, 1, 1], [], []>} : vector<8x24xf32>, vector<24x128xf32>, vector<8x128xf32> -> vector<8x128xf32>
      %c0_7 = arith.constant 0 : index
      %c0_8 = arith.constant 0 : index
      %12 = vector.load %arg8[%c0_7, %c0_8] : memref<8x1xf32, #tpu.memory_space<vmem>>, vector<8x1xf32>
      %cst_9 = arith.constant dense<0.000000e+00> : vector<8xf32>
      %13 = vector.multi_reduction <add>, %11, %cst_9 [1] : vector<8x128xf32> to vector<8xf32>
      %14 = vector.shape_cast %13 : vector<8xf32> to vector<8x1xf32>
      %15 = arith.addf %12, %14 : vector<8x1xf32>
      %c0_10 = arith.constant 0 : index
      %c0_11 = arith.constant 0 : index
      %16 = vector.load %arg8[%c0_10, %c0_11] : memref<8x1xf32, #tpu.memory_space<vmem>>, vector<8x1xf32>
      tpu.vector_store %arg8[%c0_10, %c0_11], %15 {strides = array<i32>} : memref<8x1xf32, #tpu.memory_space<vmem>>, vector<8x1xf32>,
      %c0_12 = arith.constant 0 : index
      %c0_13 = arith.constant 0 : index
      %17 = vector.load %arg9[%c0_12, %c0_13] : memref<8x1xf32, #tpu.memory_space<vmem>>, vector<8x1xf32>
      %18 = arith.mulf %11, %11 : vector<8x128xf32>
      %cst_14 = arith.constant dense<0.000000e+00> : vector<8xf32>
      %19 = vector.multi_reduction <add>, %18, %cst_14 [1] : vector<8x128xf32> to vector<8xf32>
      %20 = vector.shape_cast %19 : vector<8xf32> to vector<8x1xf32>
      %21 = arith.addf %17, %20 : vector<8x1xf32>
      %c0_15 = arith.constant 0 : index
      %c0_16 = arith.constant 0 : index
      %22 = vector.load %arg9[%c0_15, %c0_16] : memref<8x1xf32, #tpu.memory_space<vmem>>, vector<8x1xf32>
      tpu.vector_store %arg9[%c0_15, %c0_16], %21 {strides = array<i32>} : memref<8x1xf32, #tpu.memory_space<vmem>>, vector<8x1xf32>,
      %23 = arith.index_cast %arg1 : i32 to index
      %c0_17 = arith.constant 0 : index
      %c0_18 = arith.constant 0 : index
      %24 = vector.load %arg10[%23, %c0_17, %c0_18] : memref<2x8x128xf32, #tpu.memory_space<vmem>>, vector<1x8x128xf32>
      %25 = vector.shape_cast %24 : vector<1x8x128xf32> to vector<8x128xf32>
      %26 = vector.shape_cast %11 : vector<8x128xf32> to vector<1x8x128xf32>
      tpu.vector_store %arg10[%23, %c0_17, %c0_18], %26 {strides = array<i32>} : memref<2x8x128xf32, #tpu.memory_space<vmem>>, vector<1x8x128xf32>,
    } else {
    }
    %c1_i32 = arith.constant 1 : i32
    %3 = arith.cmpi eq, %arg0, %c1_i32 : i32
    %4 = arith.extui %3 : i1 to i32
    %c0_i32_1 = arith.constant 0 : i32
    %5 = arith.cmpi ne, %4, %c0_i32_1 : i32
    scf.if %5 {
      %6 = arith.index_cast %arg1 : i32 to index
      %c0 = arith.constant 0 : index
      %c0_2 = arith.constant 0 : index
      %7 = vector.load %arg10[%6, %c0, %c0_2] : memref<2x8x128xf32, #tpu.memory_space<vmem>>, vector<1x8x128xf32>
      %8 = vector.shape_cast %7 : vector<1x8x128xf32> to vector<8x128xf32>
      %c0_3 = arith.constant 0 : index
      %c0_4 = arith.constant 0 : index
      %9 = vector.load %arg8[%c0_3, %c0_4] : memref<8x1xf32, #tpu.memory_space<vmem>>, vector<8x1xf32>
      %cst = arith.constant 0.00446428591 : f32
      %10 = vector.broadcast %cst : f32 to vector<8x1xf32>
      %11 = arith.mulf %9, %10 : vector<8x1xf32>
      %c0_5 = arith.constant 0 : index
      %c0_6 = arith.constant 0 : index
      %12 = vector.load %arg9[%c0_5, %c0_6] : memref<8x1xf32, #tpu.memory_space<vmem>>, vector<8x1xf32>
      %cst_7 = arith.constant 0.00446428591 : f32
      %13 = vector.broadcast %cst_7 : f32 to vector<8x1xf32>
      %14 = arith.mulf %12, %13 : vector<8x1xf32>
      %15 = arith.mulf %11, %11 : vector<8x1xf32>
      %16 = arith.subf %14, %15 : vector<8x1xf32>
      %c0_8 = arith.constant 0 : index
      %c0_9 = arith.constant 0 : index
      %17 = vector.load %arg4[%c0_8, %c0_9] : memref<8x1xf32, #tpu.memory_space<vmem>>, vector<8x1xf32>
      %cst_10 = arith.constant 9.99999974E-6 : f32
      %18 = vector.broadcast %cst_10 : f32 to vector<8x1xf32>
      %19 = arith.addf %16, %18 : vector<8x1xf32>
      %20 = math.rsqrt %19 : vector<8x1xf32>
      %21 = arith.mulf %17, %20 : vector<8x1xf32>
      %c0_11 = arith.constant 0 : index
      %c0_12 = arith.constant 0 : index
      %22 = vector.load %arg5[%c0_11, %c0_12] : memref<8x1xf32, #tpu.memory_space<vmem>>, vector<8x1xf32>
      %23 = arith.mulf %11, %21 : vector<8x1xf32>
      %24 = arith.subf %22, %23 : vector<8x1xf32>
      %25 = vector.broadcast %21 : vector<8x1xf32> to vector<8x128xf32>
      %26 = arith.mulf %25, %8 : vector<8x128xf32>
      %27 = vector.broadcast %24 : vector<8x1xf32> to vector<8x128xf32>
      %28 = arith.addf %26, %27 : vector<8x128xf32>
      %c0_13 = arith.constant 0 : index
      %29 = memref.load %arg6[%c0_13] : memref<1xf32, #tpu.memory_space<smem>>
      %cst_14 = arith.constant 0.000000e+00 : f32
      %30 = vector.broadcast %cst_14 : f32 to vector<8x128xf32>
      %31 = arith.cmpf oge, %28, %30 : vector<8x128xf32>
      %32 = vector.broadcast %29 : f32 to vector<8x128xf32>
      %33 = arith.mulf %32, %28 : vector<8x128xf32>
      %34 = arith.select %31, %28, %33 : vector<8x128xi1>, vector<8x128xf32>
      %c0_15 = arith.constant 0 : index
      %c0_16 = arith.constant 0 : index
      %35 = vector.load %arg7[%c0_15, %c0_16] : memref<8x128xf32, #tpu.memory_space<vmem>>, vector<8x128xf32>
      tpu.vector_store %arg7[%c0_15, %c0_16], %34 {strides = array<i32>} : memref<8x128xf32, #tpu.memory_space<vmem>>, vector<8x128xf32>,
    } else {
    }
    return
  }
  func.func @transform_0(%arg0: i32, %arg1: i32) -> (i32, i32) {
    %c0_i32 = arith.constant 0 : i32
    %c0_i32_0 = arith.constant 0 : i32
    %c0_i32_1 = arith.constant 0 : i32
    return %c0_i32, %c0_i32_0 : i32, i32
  }
  func.func @transform_1(%arg0: i32, %arg1: i32) -> (i32, i32) {
    %c1_i32 = arith.constant 1 : i32
    %0 = arith.subi %c1_i32, %arg0 : i32
    %1 = arith.muli %arg1, %0 : i32
    %c0_i32 = arith.constant 0 : i32
    %c0_i32_0 = arith.constant 0 : i32
    return %c0_i32, %1 : i32, i32
  }
  func.func @transform_2(%arg0: i32, %arg1: i32) -> (i32, i32) {
    %c0_i32 = arith.constant 0 : i32
    %c0_i32_0 = arith.constant 0 : i32
    %c0_i32_1 = arith.constant 0 : i32
    return %c0_i32, %c0_i32_0 : i32, i32
  }
  func.func @transform_3(%arg0: i32, %arg1: i32) -> (i32, i32) {
    %c0_i32 = arith.constant 0 : i32
    %c0_i32_0 = arith.constant 0 : i32
    %c0_i32_1 = arith.constant 0 : i32
    return %c0_i32, %c0_i32_0 : i32, i32
  }
  func.func @transform_4(%arg0: i32, %arg1: i32) -> i32 {
    %c0_i32 = arith.constant 0 : i32
    %c0_i32_0 = arith.constant 0 : i32
    return %c0_i32 : i32
  }
  func.func @transform_5(%arg0: i32, %arg1: i32) -> (i32, i32) {
    %0 = arith.muli %arg1, %arg0 : i32
    %c0_i32 = arith.constant 0 : i32
    %c0_i32_0 = arith.constant 0 : i32
    return %c0_i32, %0 : i32, i32
  }
}

</mosaic_0001>

<llo_original>
// kernel: tpu_custom_call.1
$region0: #{tpu_custom_call.1}
  #allocation0 [shape = 'u32[]', space=smem, size = 0x4, offset = 0x4, fixed_abs, tag = 'smem constant byte address 0x4 - core index']
  #allocation1 [shape = 'u32[144,128]{1,0:T(1,128)}', space=vmem, size = 0x12000, scoped, tag = 'internal scratch']
  #allocation2 [shape = 'f32[8,1]{1,0:T(8,128)}', space=vmem, size = 0x1000, scoped, tag = 'scratch operand']
  #allocation3 [shape = 'f32[8,1]{1,0:T(8,128)}', space=vmem, size = 0x1000, scoped, tag = 'scratch operand']
  #allocation4 [shape = 'f32[2,8,128]{2,1,0:T(8,128)}', space=vmem, size = 0x2000, scoped, tag = 'scratch operand']
  #allocation5 [shape = 'f32[1]{0:T(128)S(6)}', space=smem, size = 0x200, scoped, tag = 'scoped memory for tpu_custom_call.1']
  %s0 = inlined_call_operand.vmem [shape: f32[8,24], index: 0, kind: input, shape index: {}]
  %s1 = inlined_call_operand.hbm [shape: f32[24,256], index: 1, kind: input, shape index: {}]
  %s2 = inlined_call_operand.vmem [shape: f32[8,1], index: 2, kind: input, shape index: {}]
  %s3 = inlined_call_operand.vmem [shape: f32[8,1], index: 3, kind: input, shape index: {}]
  %s4 = inlined_call_operand.<no memory space> [shape: f32[1], index: 4, kind: input, shape index: {}]
  %s5 = inlined_call_operand.hbm [shape: f32[8,256], index: 5, kind: output, shape index: {}]
  %s6 = sld [smem:[#allocation0]]
  $region69: #{tpu_custom_call.1} parent=0
    _
  %s8 = ssub.s32 1, %s6
  %s9 = scalar_select 0, %s8, %s6
  %10 = sst [smem:[#allocation5]] %s4
  $region1: #{tpu_custom_call.1} parent=0
    #allocation6 [shape = 'u8[24576]{0}', space=vmem, size = 0x6000, scoped, tag = 'input window, operand 1']
    #allocation7 [shape = 's32[2]{0}', space=sflag, size = 0x8, scoped, tag = 'scoped memory for tpu_custom_call.1']
    #allocation8 [shape = 's32[2]{0}', space=sflag, size = 0x8, scoped, tag = 'scoped memory for tpu_custom_call.1']
    #allocation9 [shape = 'u8[8192]{0}', space=vmem, size = 0x2000, scoped, tag = 'output window, operand 0']
    %11 = vsyncpa [#allocation7], 0
    %s12 = scalar_lea.sflag [#allocation7], 1
    %13 = vsyncpa %s12, 0
    %14 = vsyncpa [#allocation8], 0
    %s15 = scalar_lea.sflag [#allocation8], 1
    %16 = vsyncpa %s15, 0
    loop: start=0, step=1, limit=6
    $region2: #{tpu_custom_call.1} parent=1 // loop_pre_header
      _
    $region3: #{tpu_custom_call.1} parent=1 // loop_header
      %s18 = sphi 0, %s22
      %p19 = scmp.ge.s32.totalorder %s18, 6
      %s25 = sphi 0, %s37
      %s26 = sphi 0, %s33
      %s27 = sphi 0, %s25
      %s28 = sphi 0, %s26
      %s29 = sphi 0, %s27
      %s30 = sphi 0, %s28
      %s38 = sphi 0, %s38
      %s40 = sphi 0, %s38
      %s41 = sphi 0, %s40
      %s55 = sphi 0, %s41
      %s65 = sphi 0, %s67
      %s68 = sphi 0, %s65
      %s69 = sphi 0, %s68
      %s85 = sphi 0, %s69
      %s89 = sphi 0, %s89
      %s91 = sphi 0, %s89
      %s92 = sphi 0, %s91
      %s106 = sphi 0, %s92
      %s110 = sphi 0, %s110
      %s112 = sphi 0, %s110
      %s113 = sphi 0, %s112
      %s127 = sphi 0, %s113
      %s131 = sphi 0, %s131
      %s133 = sphi 0, %s131
      %s134 = sphi 0, %s133
      %s148 = sphi 0, %s134
      %s156 = sphi 0, %s158
      %s159 = sphi 0, %s156
      %s160 = sphi 0, %s159
      %s176 = sphi 0, %s160
    $region4: #{tpu_custom_call.1} parent=1 // loop_header_branch
      %21 = sbr.rel (%p19) target = $region8
    $region5: #{tpu_custom_call.1} parent=1 // loop_body
      %s23 = ssub.s32 %s18, 1
      %s24 = ssub.s32 %s18, 2
      %s31 = sadd.s32 1, %s26
      %p32 = scmp.ge.s32.totalorder %s31, 2
      %s33 = scalar_select %p32, 0, %s31
      %s34 = sadd.s32 1, %s25
      %s35 = scalar_select %p32, %s34, %s25
      %p36 = scmp.ge.s32.totalorder %s35, 2
      %s37 = scalar_select %p36, 0, %s35
      %s39 = sadd.s32 %s38, 1
      %p42 = scmp.eq.s32.totalorder %s18, 3
      %p43 = scmp.ne.s32.totalorder %s38, %s40
      %p44 = scmp.eq.s32.totalorder %s18, 0
      %p45 = por %p43, %p44
      %p46 = scmp.ne.s32.totalorder %s38, %s40
      %p47 = scmp.eq.s32.totalorder %s23, 3
      %p48 = por %p46, %p47
      %p49 = scmp.ne.s32.totalorder %s40, %s41
      %p50 = scmp.eq.s32.totalorder %s23, 0
      %p51 = por %p49, %p50
      %p52 = scmp.ne.s32.totalorder %s40, %s41
      %p53 = scmp.eq.s32.totalorder %s24, 3
      %p54 = por %p52, %p53
      %p56 = scmp.ne.s32.totalorder %s41, %s55
      %p57 = scmp.eq.s32.totalorder %s24, 0
      %p58 = por %p56, %p57
      %s59 = ssub.s32 1, %s25
      %s60 = smul.u32 %s26, %s59
      %s61 = ssub.s32 1, %s37
      %s62 = smul.u32 %s33, %s61
      %s63 = ssub.s32 %s60, %s62
      %p64 = scmp.eq.s32.totalorder %s63, 0
      %s66 = sadd.s32 %s65, 1
      %s67 = scalar_select %p64, %s65, %s66
      %p70 = pneg %p64
      %p71 = scmp.eq.s32.totalorder %s18, 3
      %p72 = por %p70, %p71
      %p73 = scmp.ne.s32.totalorder %s65, %s68
      %p74 = scmp.eq.s32.totalorder %s18, 0
      %p75 = por %p73, %p74
      %p76 = scmp.ne.s32.totalorder %s65, %s68
      %p77 = scmp.eq.s32.totalorder %s23, 3
      %p78 = por %p76, %p77
      %p79 = scmp.ne.s32.totalorder %s68, %s69
      %p80 = scmp.eq.s32.totalorder %s23, 0
      %p81 = por %p79, %p80
      %p82 = scmp.ne.s32.totalorder %s68, %s69
      %p83 = scmp.eq.s32.totalorder %s24, 3
      %p84 = por %p82, %p83
      %p86 = scmp.ne.s32.totalorder %s69, %s85
      %p87 = scmp.eq.s32.totalorder %s24, 0
      %p88 = por %p86, %p87
      %s90 = sadd.s32 %s89, 1
      %p93 = scmp.eq.s32.totalorder %s18, 3
      %p94 = scmp.ne.s32.totalorder %s89, %s91
      %p95 = scmp.eq.s32.totalorder %s18, 0
      %p96 = por %p94, %p95
      %p97 = scmp.ne.s32.totalorder %s89, %s91
      %p98 = scmp.eq.s32.totalorder %s23, 3
      %p99 = por %p97, %p98
      %p100 = scmp.ne.s32.totalorder %s91, %s92
      %p101 = scmp.eq.s32.totalorder %s23, 0
      %p102 = por %p100, %p101
      %p103 = scmp.ne.s32.totalorder %s91, %s92
      %p104 = scmp.eq.s32.totalorder %s24, 3
      %p105 = por %p103, %p104
      %p107 = scmp.ne.s32.totalorder %s92, %s106
      %p108 = scmp.eq.s32.totalorder %s24, 0
      %p109 = por %p107, %p108
      %s111 = sadd.s32 %s110, 1
      %p114 = scmp.eq.s32.totalorder %s18, 3
      %p115 = scmp.ne.s32.totalorder %s110, %s112
      %p116 = scmp.eq.s32.totalorder %s18, 0
      %p117 = por %p115, %p116
      %p118 = scmp.ne.s32.totalorder %s110, %s112
      %p119 = scmp.eq.s32.totalorder %s23, 3
      %p120 = por %p118, %p119
      %p121 = scmp.ne.s32.totalorder %s112, %s113
      %p122 = scmp.eq.s32.totalorder %s23, 0
      %p123 = por %p121, %p122
      %p124 = scmp.ne.s32.totalorder %s112, %s113
      %p125 = scmp.eq.s32.totalorder %s24, 3
      %p126 = por %p124, %p125
      %p128 = scmp.ne.s32.totalorder %s113, %s127
      %p129 = scmp.eq.s32.totalorder %s24, 0
      %p130 = por %p128, %p129
      %s132 = sadd.s32 %s131, 1
      %p135 = scmp.eq.s32.totalorder %s18, 3
      %p136 = scmp.ne.s32.totalorder %s131, %s133
      %p137 = scmp.eq.s32.totalorder %s18, 0
      %p138 = por %p136, %p137
      %p139 = scmp.ne.s32.totalorder %s131, %s133
      %p140 = scmp.eq.s32.totalorder %s23, 3
      %p141 = por %p139, %p140
      %p142 = scmp.ne.s32.totalorder %s133, %s134
      %p143 = scmp.eq.s32.totalorder %s23, 0
      %p144 = por %p142, %p143
      %p145 = scmp.ne.s32.totalorder %s133, %s134
      %p146 = scmp.eq.s32.totalorder %s24, 3
      %p147 = por %p145, %p146
      %p149 = scmp.ne.s32.totalorder %s134, %s148
      %p150 = scmp.eq.s32.totalorder %s24, 0
      %p151 = por %p149, %p150
      %s152 = smul.u32 %s26, %s25
      %s153 = smul.u32 %s33, %s37
      %s154 = ssub.s32 %s152, %s153
      %p155 = scmp.eq.s32.totalorder %s154, 0
      %s157 = sadd.s32 %s156, 1
      %s158 = scalar_select %p155, %s156, %s157
      %p161 = pneg %p155
      %p162 = scmp.eq.s32.totalorder %s18, 3
      %p163 = por %p161, %p162
      %p164 = scmp.ne.s32.totalorder %s156, %s159
      %p165 = scmp.eq.s32.totalorder %s18, 0
      %p166 = por %p164, %p165
      %p167 = scmp.ne.s32.totalorder %s156, %s159
      %p168 = scmp.eq.s32.totalorder %s23, 3
      %p169 = por %p167, %p168
      %p170 = scmp.ne.s32.totalorder %s159, %s160
      %p171 = scmp.eq.s32.totalorder %s23, 0
      %p172 = por %p170, %p171
      %p173 = scmp.ne.s32.totalorder %s159, %s160
      %p174 = scmp.eq.s32.totalorder %s24, 3
      %p175 = por %p173, %p174
      %p177 = scmp.ne.s32.totalorder %s160, %s176
      %p178 = scmp.eq.s32.totalorder %s24, 0
      %p179 = por %p177, %p178
      %p180 = scmp.le.s32.totalorder 1, %s18
      %p181 = scmp.lt.s32.totalorder %s18, 5
      %p182 = pnand %p180, %p181
      %p183 = pneg %p182
      // Predicated region
      $region9: #{tpu_custom_call.1} parent=5 // pred_check
        _
      $region10: #{tpu_custom_call.1} parent=5 // pred_check_branch
        %185 = sbr.rel (%p182) target = $region12
      $region11: #{tpu_custom_call.1} parent=5 // pred_region
        %s186 = ssub.s32 %s18, 1
        // Predicated region
        $region13: #{tpu_custom_call.1} parent=11 // pred_check
          %p187 = pneg %p51
        $region14: #{tpu_custom_call.1} parent=11 // pred_check_branch
          %189 = sbr.rel (%p187) target = $region16
        $region15: #{tpu_custom_call.1} parent=11 // pred_region
          _
        $region16: #{tpu_custom_call.1} parent=11 // pred_fallthru
          _
        // Predicated region
        $region17: #{tpu_custom_call.1} parent=11 // pred_check
          %p190 = pneg %p102
        $region18: #{tpu_custom_call.1} parent=11 // pred_check_branch
          %192 = sbr.rel (%p190) target = $region20
        $region19: #{tpu_custom_call.1} parent=11 // pred_region
          _
        $region20: #{tpu_custom_call.1} parent=11 // pred_fallthru
          _
        // Predicated region
        $region21: #{tpu_custom_call.1} parent=11 // pred_check
          %p193 = pneg %p123
        $region22: #{tpu_custom_call.1} parent=11 // pred_check_branch
          %195 = sbr.rel (%p193) target = $region24
        $region23: #{tpu_custom_call.1} parent=11 // pred_region
          _
        $region24: #{tpu_custom_call.1} parent=11 // pred_fallthru
          _
        // Predicated region
        $region25: #{tpu_custom_call.1} parent=11 // pred_check
          %p196 = pneg %p144
        $region26: #{tpu_custom_call.1} parent=11 // pred_check_branch
          %198 = sbr.rel (%p196) target = $region28
        $region27: #{tpu_custom_call.1} parent=11 // pred_region
          _
        $region28: #{tpu_custom_call.1} parent=11 // pred_fallthru
          _
      $region12: #{tpu_custom_call.1} parent=5 // pred_fallthru
        _
      %p199 = scmp.lt.s32.totalorder %s18, 4
      // Predicated region
      $region29: #{tpu_custom_call.1} parent=5 // pred_check
        %p200 = pneg %p199
      $region30: #{tpu_custom_call.1} parent=5 // pred_check_branch
        %202 = sbr.rel (%p200) target = $region32
      $region31: #{tpu_custom_call.1} parent=5 // pred_region
        // Predicated region
        $region33: #{tpu_custom_call.1} parent=31 // pred_check
          %p203 = pneg %p75
        $region34: #{tpu_custom_call.1} parent=31 // pred_check_branch
          %205 = sbr.rel (%p203) target = $region36
        $region35: #{tpu_custom_call.1} parent=31 // pred_region
          %s206 = sand.u32 %s65, 1
          %s207 = scalar_lea.sflag [#allocation7], %s206
          %s208 = sand.u32 %s65, 1
          %s209 = smul.addr %s208, 24
          %s210 = scalar_lea.vmem [#allocation6], %s209
          %s211 = ssub.s32 1, %s25
          %s212 = smul.u32 %s26, %s211
          %s214 = ssub.s32 384, 384
          %215 = vsyncadd %s207, %s214
          %s216 = smul.addr %s212, 128
          %s217 = scalar_lea.hbm %s1, %s216
          %s218 = sshll.u32 %s210, 4
          %s219 = int_to_ptr.vmem [resolvable:$true] %s218
          %224 = dma.hbm_to_vmem [thread:$0]  %s217, 384, %s219, %s207, 256, 128, 8
        $region36: #{tpu_custom_call.1} parent=31 // pred_fallthru
          _
      $region32: #{tpu_custom_call.1} parent=5 // pred_fallthru
        _
      %p225 = scmp.le.s32.totalorder 1, %s18
      %p226 = scmp.lt.s32.totalorder %s18, 5
      %p227 = pnand %p225, %p226
      %p228 = pneg %p227
      // Predicated region
      $region37: #{tpu_custom_call.1} parent=5 // pred_check
        _
      $region38: #{tpu_custom_call.1} parent=5 // pred_check_branch
        %230 = sbr.rel (%p227) target = $region40
      $region39: #{tpu_custom_call.1} parent=5 // pred_region
        %s231 = ssub.s32 %s18, 1
        %s232 = sand.u32 %s68, 1
        %s233 = scalar_lea.sflag [#allocation7], %s232
        %s234 = sand.u32 %s68, 1
        %s235 = smul.addr %s234, 24
        %s236 = scalar_lea.vmem [#allocation6], %s235
        // Predicated region
        $region41: #{tpu_custom_call.1} parent=39 // pred_check
          %p237 = pneg %p81
        $region42: #{tpu_custom_call.1} parent=39 // pred_check_branch
          %239 = sbr.rel (%p237) target = $region44
        $region43: #{tpu_custom_call.1} parent=39 // pred_region
          %240 = dma.done %s233, 384
        $region44: #{tpu_custom_call.1} parent=39 // pred_fallthru
          _
        %p241 = pneg %p51
        %p242 = pneg %p48
        %s243 = sand.u32 %s68, 1
        %s244 = scalar_lea.sflag [#allocation7], %s243
        %s245 = sand.u32 %s68, 1
        %s246 = smul.addr %s245, 24
        %s247 = scalar_lea.vmem [#allocation6], %s246
        %p248 = pneg %p81
        %p249 = pneg %p78
        %p250 = pneg %p102
        %p251 = pneg %p99
        %p252 = pneg %p123
        %p253 = pneg %p120
        %p254 = pneg %p144
        %p255 = pneg %p141
        %p256 = pneg %p172
        %p257 = pneg %p169
        %s258 = sand.u32 %s159, 1
        %s259 = scalar_lea.sflag [#allocation8], %s258
        %s260 = sand.u32 %s159, 1
        %s261 = smul.addr %s260, 8
        %s262 = scalar_lea.vmem [#allocation9], %s261
        %s263 = ssub.s32 1, %s27
        %s264 = smul.u32 %s28, %s263
        %s265 = smul.u32 %s28, %s27
        %p266 = scmp.eq.s32.totalorder %s27, 0
        // Predicated region
        $region45: #{tpu_custom_call.1} parent=39 // pred_check
          %p267 = pneg %p266
        $region46: #{tpu_custom_call.1} parent=39 // pred_check_branch
          %269 = sbr.rel (%p267) target = $region48
        $region47: #{tpu_custom_call.1} parent=39 // pred_region
          %p270 = scmp.eq.s32.totalorder %s28, 0
          // Predicated region
          $region49: #{tpu_custom_call.1} parent=47 // pred_check
            %p271 = pneg %p270
          $region50: #{tpu_custom_call.1} parent=47 // pred_check_branch
            %273 = sbr.rel (%p271) target = $region52
          $region51: #{tpu_custom_call.1} parent=47 // pred_region
            %vm274 = vcmask 7168
            %275 = vst.msk [vmem:[#allocation2] sm:$0xff] %vm274, 0.0
            %276 = vst.msk [vmem:[#allocation3] sm:$0xff] %vm274, 0.0
          $region52: #{tpu_custom_call.1} parent=47 // pred_fallthru
            _
          %v277 = vld [vmem:[%s0] sm:$0xff]
          %v278 = vld [vmem:[%s236] sm:$0xff]
          %v279 = vld [vmem:[%s236 + $0x8] sm:$0xff]
          %v280 = vld [vmem:[%s236 + $0x10] sm:$0xff]
          %vm281 = vcmask 195584
          %v283 = vsel %vm281, %v277, 0
          %285 = vmatprep.subr.mxu0 0.0
          %286 = vmatpush1.msra.mxu0 %v278
          %287 = vmatprep.subr.mxu0 0.0
          %288 = vmatpush1.msra.mxu0 %v279
          %289 = vmatprep.subr.mxu0 0.0
          %290 = vmatpush1.msra.mxu0 %v280
          %291 = vmatprep.subr.mxu0 0.0
          %292 = vmatpush1.msra.mxu0 0.0
          %293 = vmatprep.subr.mxu0 0.0
          %294 = vmatpush1.msra.mxu0 0.0
          %295 = vmatprep.subr.mxu0 0.0
          %296 = vmatpush1.msra.mxu0 0.0
          %297 = vmatprep.subr.mxu0 0.0
          %298 = vmatpush1.msra.mxu0 0.0
          %299 = vmatprep.subr.mxu0 0.0
          %300 = vmatpush1.msra.mxu0 0.0
          %301 = vmatprep.subr.mxu0 0.0
          %302 = vmatpush1.msra.mxu0 0.0
          %303 = vmatprep.subr.mxu0 0.0
          %304 = vmatpush1.msra.mxu0 0.0
          %305 = vmatprep.subr.mxu0 0.0
          %306 = vmatpush1.msra.mxu0 0.0
          %307 = vmatprep.subr.mxu0 0.0
          %308 = vmatpush1.msra.mxu0 0.0
          %309 = vmatprep.subr.mxu0 0.0
          %310 = vmatpush1.msra.mxu0 0.0
          %311 = vmatprep.subr.mxu0 0.0
          %312 = vmatpush1.msra.mxu0 0.0
          %313 = vmatprep.subr.mxu0 0.0
          %314 = vmatpush1.msra.mxu0 0.0
          %315 = vmatprep.subr.mxu0 0.0
          %316 = vmatpush1.msra.mxu0 0.0
          %317 = vmatprep.subr.mxu0 0.0
          %318 = vmatpush1.msra.mxu0 0.0
          %319 = vmatprep.subr.mxu0 0.0
          %320 = vmatpush1.msra.mxu0 0.0
          %321 = vmatprep.subr.mxu0 0.0
          %322 = vmatpush1.msra.mxu0 0.0
          %323 = vmatprep.subr.mxu0 0.0
          %324 = vmatpush1.msra.mxu0 0.0
          %325 = vmatprep.subr.mxu0 0.0
          %326 = vmatpush1.msra.mxu0 0.0
          %327 = vmatprep.subr.mxu0 0.0
          %328 = vmatpush1.msra.mxu0 0.0
          %329 = vmatprep.subr.mxu0 0.0
          %330 = vmatpush1.msra.mxu0 0.0
          %331 = vmatprep.subr.mxu0 0.0
          %332 = vmatpush1.msra.mxu0 0.0
          %333 = vmatprep.subr.mxu0 0.0
          %334 = vmatpush1.msra.mxu0 0.0
          %335 = vmatprep.subr.mxu0 0.0
          %336 = vmatpush1.msra.mxu0 0.0
          %337 = vmatprep.subr.mxu0 0.0
          %338 = vmatpush1.msra.mxu0 0.0
          %339 = vmatprep.subr.mxu0 0.0
          %340 = vmatpush1.msra.mxu0 0.0
          %341 = vmatprep.subr.mxu0 0.0
          %342 = vmatpush1.msra.mxu0 0.0
          %343 = vmatprep.subr.mxu0 0.0
          %344 = vmatpush1.msra.mxu0 0.0
          %345 = vmatprep.subr.mxu0 0.0
          %346 = vmatpush1.msra.mxu0 0.0
          %347 = vmatprep.subr.mxu0 0.0
          %348 = vmatpush1.msra.mxu0 0.0
          %349 = vmatprep.mubr.f32.mxu0 0.0
          %350 = vmatmul.mubr.f32.gmra.mrb[0].mxu0 %v283
          %v351 = vpop.f32.mrb[0].mxu0
          %v352 = vadd.f32 0.0, %v351
          %v353 = vpop.f32.mrb[0].mxu0
          %354 = vdwg.mxu0
          %v355 = vld [vmem:[#allocation2] sm:$0xff]
          %356 = vadd.xlane.f32.xlu0 %v352
          %v357 = vpop.xlane.xlu0 %356
          %v358 = vadd.f32 %v355, %v357
          %vm359 = vcmask 7168
          %360 = vst.msk [vmem:[#allocation2] sm:$0xff] %vm359, %v358
          %v361 = vld [vmem:[#allocation3] sm:$0xff]
          %v362 = vmul.f32 %v352, %v352
          %363 = vadd.xlane.f32.xlu0 %v362
          %v364 = vpop.xlane.xlu0 %363
          %v365 = vadd.f32 %v361, %v364
          %366 = vst.msk [vmem:[#allocation3] sm:$0xff] %vm359, %v365
          %s367 = smul.u32 %s28, 8
          %s368 = scalar_lea.vmem [#allocation4], %s367
          %369 = vst [vmem:[%s368] sm:$0xff] %v352
        $region48: #{tpu_custom_call.1} parent=39 // pred_fallthru
          _
        %p370 = scmp.eq.s32.totalorder %s27, 1
        // Predicated region
        $region53: #{tpu_custom_call.1} parent=39 // pred_check
          %p371 = pneg %p370
        $region54: #{tpu_custom_call.1} parent=39 // pred_check_branch
          %373 = sbr.rel (%p371) target = $region56
        $region55: #{tpu_custom_call.1} parent=39 // pred_region
          %s374 = smul.u32 %s28, 8
          %s375 = scalar_lea.vmem [#allocation4], %s374
          %v376 = vld [vmem:[%s375] sm:$0xff]
          %v377 = vld [vmem:[#allocation2] sm:$0xff]
          %v378 = vmul.f32 %v377, 0.004464286
          %v379 = vld [vmem:[#allocation3] sm:$0xff]
          %v380 = vmul.f32 %v379, 0.004464286
          %v381 = vmul.f32 %v378, %v378
          %v382 = vsub.f32 %v380, %v381
          %v383 = vld [vmem:[%s2] sm:$0xff]
          %v384 = vadd.f32 %v382, 1e-05
          %v385 = vrsqrt.pop %v384
          %v386 = vmul.f32 %v383, %v385
          %v387 = vld [vmem:[%s3] sm:$0xff]
          %v388 = vmul.f32 %v378, %v386
          %v389 = vsub.f32 %v387, %v388
          %391 = vset.pattern.permute.xlu0 0
          %392 = vperm.xlu0 %391, %v386
          %v393 = vpop.permute.xlu0 %392
          %v395 = vmul.f32 %v393, %v376
          %397 = vset.pattern.permute.xlu0 0
          %398 = vperm.xlu0 %397, %v389
          %v399 = vpop.permute.xlu0 %398
          %v401 = vadd.f32 %v395, %v399
          %s402 = sld [smem:[#allocation5]]
          %vm403 = vcmp.ge.f32.partialorder %v401, 0.0
          %v404 = vstv %s402
          %v405 = vmul.f32 %v404, %v401
          %v406 = vsel %vm403, %v401, %v405
          %407 = vst [vmem:[%s262] sm:$0xff] %v406
        $region56: #{tpu_custom_call.1} parent=39 // pred_fallthru
          _
        %s408 = sand.u32 %s159, 1
        %s409 = scalar_lea.sflag [#allocation8], %s408
        %s410 = sand.u32 %s159, 1
        %s411 = smul.addr %s410, 8
        %s412 = scalar_lea.vmem [#allocation9], %s411
        // Predicated region
        $region57: #{tpu_custom_call.1} parent=39 // pred_check
          %p413 = pneg %p169
        $region58: #{tpu_custom_call.1} parent=39 // pred_check_branch
          %415 = sbr.rel (%p413) target = $region60
        $region59: #{tpu_custom_call.1} parent=39 // pred_region
          %s416 = smul.u32 %s28, %s27
          %s418 = ssub.s32 128, 128
          %419 = vsyncadd %s409, %s418
          %s420 = smul.addr %s416, 128
          %s421 = scalar_lea.hbm %s5, %s420
          %s423 = sshll.u32 %s412, 4
          %s424 = int_to_ptr.vmem [resolvable:$true] %s423
          %426 = dma.vmem_to_hbm [thread:$0]  %s424, 128, %s421, %s409
        $region60: #{tpu_custom_call.1} parent=39 // pred_fallthru
          _
      $region40: #{tpu_custom_call.1} parent=5 // pred_fallthru
        _
      %p427 = scmp.le.s32.totalorder 2, %s18
      // Predicated region
      $region61: #{tpu_custom_call.1} parent=5 // pred_check
        %p428 = pneg %p427
      $region62: #{tpu_custom_call.1} parent=5 // pred_check_branch
        %430 = sbr.rel (%p428) target = $region64
      $region63: #{tpu_custom_call.1} parent=5 // pred_region
        %s431 = ssub.s32 %s18, 2
        // Predicated region
        $region65: #{tpu_custom_call.1} parent=63 // pred_check
          %p432 = pneg %p175
        $region66: #{tpu_custom_call.1} parent=63 // pred_check_branch
          %434 = sbr.rel (%p432) target = $region68
        $region67: #{tpu_custom_call.1} parent=63 // pred_region
          %s435 = sand.u32 %s160, 1
          %s436 = scalar_lea.sflag [#allocation8], %s435
          %s437 = sand.u32 %s160, 1
          %s438 = smul.addr %s437, 8
          %s439 = scalar_lea.vmem [#allocation9], %s438
          %440 = dma.done %s436, 128
        $region68: #{tpu_custom_call.1} parent=63 // pred_fallthru
          _
      $region64: #{tpu_custom_call.1} parent=5 // pred_fallthru
        _
    $region6: #{tpu_custom_call.1} parent=1 // loop_footer
      %s22 = sadd.s32 1, %s18
    $region7: #{tpu_custom_call.1} parent=1 // loop_footer_branch
      %17 = sbr.rel target = $region3
    $region8: #{tpu_custom_call.1} parent=1 // loop_exit
      _
    %441 = vsyncpa [#allocation7], 1
    %s442 = scalar_lea.sflag [#allocation7], 1
    %443 = vsyncpa %s442, 1
    %444 = vsyncpa [#allocation8], 1
    %s445 = scalar_lea.sflag [#allocation8], 1
    %446 = vsyncpa %s445, 1

</llo_original>
